<compile_context>
chip_gen: v7x
topology: tpu7x:2x2x1
jax: 0.10.0
libtpu: 0.0.40
codegen_flags: <defaults>
</compile_context>

<pallas_src>
import functools

import jax
import jax.numpy as jnp
from jax.experimental import pallas as pl
from jax.experimental.pallas import tpu as pltpu

MAX_BATCH_TILE = 4096   # per-step VMEM (x + intermediates + out, double-buffered)
                        # stays ~2-3 MiB at H=32 -> safe on v5e's 16 MiB default.


def policy_mlp_kernel(x_ref, w1_ref, b1_ref, w2_ref, b2_ref,
                      w3_ref, b3_ref, maxu_ref, o_ref):
    """One batch tile of particles; all three layers on the MXU/VPU/EUP in VMEM."""
    cd = x_ref.dtype                     # compute dtype (f32, or bf16 on v6e/v7x)
    x = x_ref[...]
    z1 = jnp.dot(x, w1_ref[...], preferred_element_type=jnp.float32) + b1_ref[...]
    h1 = jnp.tanh(z1.astype(cd))         # tanh chain in compute dtype (EUP)
    z2 = jnp.dot(h1, w2_ref[...], preferred_element_type=jnp.float32) + b2_ref[...]
    h2 = jnp.tanh(z2.astype(cd))
    z3 = jnp.dot(h2, w3_ref[...], preferred_element_type=jnp.float32) + b3_ref[...]
    # Final squash: u = max_u * tanh(pre).  Action dim is tiny, keep f32 here.
    o_ref[...] = (maxu_ref[...].astype(jnp.float32) * jnp.tanh(z3)).astype(o_ref.dtype)


@functools.partial(jax.jit, static_argnames=("batch_tile",))
def policy_forward_pallas(x, params, *, batch_tile=None):
    """MC-PILCO policy MLP as a single Pallas kernel.

    x may be [B, D] or have extra leading dims (e.g. [T, B, D] for many
    independent evaluations); leading dims are flattened so everything runs in
    one pallas_call with the weights resident across grid steps.
    """
    w1, b1, w2, b2, w3, b3, max_u = params
    out_dtype = x.dtype
    x = x.astype(w1.dtype)               # compute dtype fixed at param build time

    orig_shape = x.shape
    if x.ndim > 2:
        x = x.reshape(-1, x.shape[-1])   # fuse repeated evaluations into one call
    B, D = x.shape
    H = w1.shape[1]
    U = w3.shape[1]

    # ---- batch tiling: one block unless the particle count is large --------
    if batch_tile is None:
        batch_tile = B if B <= MAX_BATCH_TILE else MAX_BATCH_TILE
    if batch_tile >= B:
        batch_tile = B                   # block dim == full array dim is legal
    else:
        batch_tile = ((batch_tile + 7) // 8) * 8   # sublane alignment
    grid = (pl.cdiv(B, batch_tile),)     # ragged final block handled by Pallas
                                         # (OOB output rows are masked off).

    # Weights/biases/max_u use a constant index_map, so across grid steps they
    # are fetched once and stay resident in VMEM (no re-DMA per step).
    # TODO(synk): could additionally mark them pipeline_mode=pl.Buffered(1) to
    # skip double-buffering; tiny win, left at the default for robustness.
    const2d = lambda shape: pl.BlockSpec(shape, lambda i: (0, 0))

    out = pl.pallas_call(
        policy_mlp_kernel,
        out_shape=jax.ShapeDtypeStruct((B, U), out_dtype),
        grid_spec=pltpu.PrefetchScalarGridSpec(
            num_scalar_prefetch=0,
            grid=grid,
            in_specs=[
                pl.BlockSpec((batch_tile, D), lambda i: (i, 0)),   # x tile
                const2d((D, H)), const2d((1, H)),                  # layer 1
                const2d((H, H)), const2d((1, H)),                  # layer 2
                const2d((H, U)), const2d((1, U)),                  # layer 3
                const2d((1, U)),                                   # max_u squash
            ],
            out_specs=pl.BlockSpec((batch_tile, U), lambda i: (i, 0)),
        ),
        compiler_params=pltpu.CompilerParams(
            dimension_semantics=("parallel",)),
    )(x, w1, b1, w2, b2, w3, b3, max_u)

    if len(orig_shape) > 2:
        out = out.reshape(*orig_shape[:-1], U)
    return out


class MCPILCOAgentPallas:
    """Pallas analogue of MCPILCOAgent: calling it evaluates its policy."""

    def __init__(self, policy_params, compute_dtype=jnp.float32):
        # One-time work hoisted out of the per-call path: cast weights to the
        # compute dtype here.  Use jnp.bfloat16 on v6e/v7x (native bf16
        # VPU/EUP; halves tanh + DMA cost); keep float32 (default) on v5e.
        self.policy_params = tuple(jnp.asarray(p, compute_dtype)
                                   for p in policy_params)

    def __call__(self, x):
        return self.forward(x)

    def forward(self, x):
        # Equivalent to `return self.policy(x)` in the PyTorch module.
        # x may carry extra leading dims ([T, B, D]) to fuse many independent
        # policy evaluations into one kernel launch.
        return policy_forward_pallas(x, self.policy_params)

    # TODO(synk): train() / fit_dynamics() / sample_initial_states() are
    # optimizer-driven training loops (Adam, autograd, dataset sampling) with
    # no clean single-kernel Pallas equivalent.  A true sequential rollout
    # (state_{t+1} depends on action_t) would additionally need the dynamics
    # model fused into the same kernel (lax.fori_loop over timesteps with all
    # weights resident in VMEM); only the policy forward pass is implemented.


def make_policy_params(key, state_dim, hidden, action_dim, max_u_val=1.0):
    k1, k2, k3, k4, k5 = jax.random.split(key, 5)
    s1 = 1.0 / jnp.sqrt(jnp.float32(state_dim))
    s2 = 1.0 / jnp.sqrt(jnp.float32(hidden))
    w1 = s1 * jax.random.normal(k1, (state_dim, hidden), jnp.float32)
    b1 = 0.1 * jax.random.normal(k4, (1, hidden), jnp.float32)
    w2 = s2 * jax.random.normal(k2, (hidden, hidden), jnp.float32)
    b2 = 0.1 * jax.random.normal(k5, (1, hidden), jnp.float32)
    w3 = s2 * jax.random.normal(k3, (hidden, action_dim), jnp.float32)
    b3 = jnp.zeros((1, action_dim), jnp.float32)
    max_u = jnp.full((1, action_dim), max_u_val, jnp.float32)
    return (w1, b1, w2, b2, w3, b3, max_u)


def reference_forward(x, params):
    w1, b1, w2, b2, w3, b3, max_u = params
    h1 = jnp.tanh(x @ w1 + b1)
    h2 = jnp.tanh(h1 @ w2 + b2)
    return max_u * jnp.tanh(h2 @ w3 + b3)


if __name__ == "__main__":
    key = jax.random.PRNGKey(0)
    kx, kp, kt = jax.random.split(key, 3)

    B, D, H, U = 128, 8, 32, 4          # particles, state dim, hidden, action dim
    x = jax.random.normal(kx, (B, D), jnp.float32)
    params = make_policy_params(kp, D, H, U)

    agent = MCPILCOAgentPallas(params)   # float32 compute: safe on v5e/v6e/v7x
    u = jax.block_until_ready(agent(x))
    u_ref = reference_forward(x, params)
    assert u.shape == (B, U)
    # Tolerance accounts for possible MXU bf16-pass precision differences
    # between the in-kernel dots and the XLA reference matmuls.
    assert jnp.allclose(u, u_ref, atol=2e-2, rtol=2e-2)

    # Ragged particle count with an explicit small tile: exercises grid > 1
    # and a masked final block (no wrapper-side batch padding anywhere).
    x_odd = jax.random.normal(kt, (37, D), jnp.float32)
    u_odd = jax.block_until_ready(
        policy_forward_pallas(x_odd, agent.policy_params, batch_tile=16))
    assert u_odd.shape == (37, U)
    assert jnp.allclose(u_odd, reference_forward(x_odd, params),
                        atol=2e-2, rtol=2e-2)

    # Fused multi-evaluation: all timesteps of a pre-collected rollout in ONE
    # pallas_call (weights DMA'd once, resident across the batch grid).
    T = 3
    xs = jax.random.normal(kx, (T, 16, D), jnp.float32)
    us = jax.block_until_ready(agent(xs))
    assert us.shape == (T, 16, U)
    assert jnp.allclose(us, reference_forward(xs, params), atol=2e-2, rtol=2e-2)

    print("KERNEL_OK")
</pallas_src>

<mosaic_0001>
module attributes {stable_mosaic.version = 11 : i64} {
  func.func @policy_mlp_kernel(%arg0: i32, %arg1: memref<128x8xf32, #tpu.memory_space<vmem>>, %arg2: memref<8x32xf32, #tpu.memory_space<vmem>>, %arg3: memref<1x32xf32, #tpu.memory_space<vmem>>, %arg4: memref<32x32xf32, #tpu.memory_space<vmem>>, %arg5: memref<1x32xf32, #tpu.memory_space<vmem>>, %arg6: memref<32x4xf32, #tpu.memory_space<vmem>>, %arg7: memref<1x4xf32, #tpu.memory_space<vmem>>, %arg8: memref<1x4xf32, #tpu.memory_space<vmem>>, %arg9: memref<128x4xf32, #tpu.memory_space<vmem>>) attributes {dimension_semantics = [#tpu.dimension_semantics<parallel>], iteration_bounds = array<i64: 1>, scalar_prefetch = 0 : i64, scratch_operands = 0 : i64, tpu.core_type = #tpu.core_type<tc>, window_params = [{transform_indices = @transform_0, window_bounds = array<i64: 128, 8>}, {pipeline_mode = #tpu.pipeline_mode<synchronous>, transform_indices = @transform_1, window_bounds = array<i64: 8, 32>}, {pipeline_mode = #tpu.pipeline_mode<synchronous>, transform_indices = @transform_2, window_bounds = array<i64: 1, 32>}, {pipeline_mode = #tpu.pipeline_mode<synchronous>, transform_indices = @transform_3, window_bounds = array<i64: 32, 32>}, {pipeline_mode = #tpu.pipeline_mode<synchronous>, transform_indices = @transform_4, window_bounds = array<i64: 1, 32>}, {pipeline_mode = #tpu.pipeline_mode<synchronous>, transform_indices = @transform_5, window_bounds = array<i64: 32, 4>}, {pipeline_mode = #tpu.pipeline_mode<synchronous>, transform_indices = @transform_6, window_bounds = array<i64: 1, 4>}, {pipeline_mode = #tpu.pipeline_mode<synchronous>, transform_indices = @transform_7, window_bounds = array<i64: 1, 4>}, {transform_indices = @transform_8, window_bounds = array<i64: 128, 4>}]} {
    %c0 = arith.constant 0 : index
    %c0_0 = arith.constant 0 : index
    %0 = vector.load %arg1[%c0, %c0_0] : memref<128x8xf32, #tpu.memory_space<vmem>>, vector<128x8xf32>
    %c0_1 = arith.constant 0 : index
    %c0_2 = arith.constant 0 : index
    %1 = vector.load %arg2[%c0_1, %c0_2] : memref<8x32xf32, #tpu.memory_space<vmem>>, vector<8x32xf32>
    %cst = arith.constant dense<0.000000e+00> : vector<128x32xf32>
    %2 = tpu.matmul %0, %1, %cst {dimension_numbers = #tpu.dot_dimension_numbers<[1], [0], [0], [1], [0, 0, 1, 1], [], []>} : vector<128x8xf32>, vector<8x32xf32>, vector<128x32xf32> -> vector<128x32xf32>
    %c0_3 = arith.constant 0 : index
    %c0_4 = arith.constant 0 : index
    %3 = vector.load %arg3[%c0_3, %c0_4] : memref<1x32xf32, #tpu.memory_space<vmem>>, vector<1x32xf32>
    %4 = vector.broadcast %3 : vector<1x32xf32> to vector<128x32xf32>
    %5 = arith.addf %2, %4 : vector<128x32xf32>
    %6 = math.tanh %5 : vector<128x32xf32>
    %c0_5 = arith.constant 0 : index
    %c0_6 = arith.constant 0 : index
    %7 = vector.load %arg4[%c0_5, %c0_6] : memref<32x32xf32, #tpu.memory_space<vmem>>, vector<32x32xf32>
    %cst_7 = arith.constant dense<0.000000e+00> : vector<128x32xf32>
    %8 = tpu.matmul %6, %7, %cst_7 {dimension_numbers = #tpu.dot_dimension_numbers<[1], [0], [0], [1], [0, 0, 1, 1], [], []>} : vector<128x32xf32>, vector<32x32xf32>, vector<128x32xf32> -> vector<128x32xf32>
    %c0_8 = arith.constant 0 : index
    %c0_9 = arith.constant 0 : index
    %9 = vector.load %arg5[%c0_8, %c0_9] : memref<1x32xf32, #tpu.memory_space<vmem>>, vector<1x32xf32>
    %10 = vector.broadcast %9 : vector<1x32xf32> to vector<128x32xf32>
    %11 = arith.addf %8, %10 : vector<128x32xf32>
    %12 = math.tanh %11 : vector<128x32xf32>
    %c0_10 = arith.constant 0 : index
    %c0_11 = arith.constant 0 : index
    %13 = vector.load %arg6[%c0_10, %c0_11] : memref<32x4xf32, #tpu.memory_space<vmem>>, vector<32x4xf32>
    %cst_12 = arith.constant dense<0.000000e+00> : vector<128x4xf32>
    %14 = tpu.matmul %12, %13, %cst_12 {dimension_numbers = #tpu.dot_dimension_numbers<[1], [0], [0], [1], [0, 0, 1, 1], [], []>} : vector<128x32xf32>, vector<32x4xf32>, vector<128x4xf32> -> vector<128x4xf32>
    %c0_13 = arith.constant 0 : index
    %c0_14 = arith.constant 0 : index
    %15 = vector.load %arg7[%c0_13, %c0_14] : memref<1x4xf32, #tpu.memory_space<vmem>>, vector<1x4xf32>
    %16 = vector.broadcast %15 : vector<1x4xf32> to vector<128x4xf32>
    %17 = arith.addf %14, %16 : vector<128x4xf32>
    %c0_15 = arith.constant 0 : index
    %c0_16 = arith.constant 0 : index
    %18 = vector.load %arg8[%c0_15, %c0_16] : memref<1x4xf32, #tpu.memory_space<vmem>>, vector<1x4xf32>
    %19 = math.tanh %17 : vector<128x4xf32>
    %20 = vector.broadcast %18 : vector<1x4xf32> to vector<128x4xf32>
    %21 = arith.mulf %20, %19 : vector<128x4xf32>
    %c0_17 = arith.constant 0 : index
    %c0_18 = arith.constant 0 : index
    %22 = vector.load %arg9[%c0_17, %c0_18] : memref<128x4xf32, #tpu.memory_space<vmem>>, vector<128x4xf32>
    tpu.vector_store %arg9[%c0_17, %c0_18], %21 {strides = array<i32>} : memref<128x4xf32, #tpu.memory_space<vmem>>, vector<128x4xf32>,
    return
  }
  func.func @transform_0(%arg0: i32) -> (i32, i32) {
    %c0_i32 = arith.constant 0 : i32
    %c0_i32_0 = arith.constant 0 : i32
    return %arg0, %c0_i32 : i32, i32
  }
  func.func @transform_1(%arg0: i32) -> (i32, i32) {
    %c0_i32 = arith.constant 0 : i32
    %c0_i32_0 = arith.constant 0 : i32
    %c0_i32_1 = arith.constant 0 : i32
    return %c0_i32, %c0_i32_0 : i32, i32
  }
  func.func @transform_2(%arg0: i32) -> (i32, i32) {
    %c0_i32 = arith.constant 0 : i32
    %c0_i32_0 = arith.constant 0 : i32
    %c0_i32_1 = arith.constant 0 : i32
    return %c0_i32, %c0_i32_0 : i32, i32
  }
  func.func @transform_3(%arg0: i32) -> (i32, i32) {
    %c0_i32 = arith.constant 0 : i32
    %c0_i32_0 = arith.constant 0 : i32
    %c0_i32_1 = arith.constant 0 : i32
    return %c0_i32, %c0_i32_0 : i32, i32
  }
  func.func @transform_4(%arg0: i32) -> (i32, i32) {
    %c0_i32 = arith.constant 0 : i32
    %c0_i32_0 = arith.constant 0 : i32
    %c0_i32_1 = arith.constant 0 : i32
    return %c0_i32, %c0_i32_0 : i32, i32
  }
  func.func @transform_5(%arg0: i32) -> (i32, i32) {
    %c0_i32 = arith.constant 0 : i32
    %c0_i32_0 = arith.constant 0 : i32
    %c0_i32_1 = arith.constant 0 : i32
    return %c0_i32, %c0_i32_0 : i32, i32
  }
  func.func @transform_6(%arg0: i32) -> (i32, i32) {
    %c0_i32 = arith.constant 0 : i32
    %c0_i32_0 = arith.constant 0 : i32
    %c0_i32_1 = arith.constant 0 : i32
    return %c0_i32, %c0_i32_0 : i32, i32
  }
  func.func @transform_7(%arg0: i32) -> (i32, i32) {
    %c0_i32 = arith.constant 0 : i32
    %c0_i32_0 = arith.constant 0 : i32
    %c0_i32_1 = arith.constant 0 : i32
    return %c0_i32, %c0_i32_0 : i32, i32
  }
  func.func @transform_8(%arg0: i32) -> (i32, i32) {
    %c0_i32 = arith.constant 0 : i32
    %c0_i32_0 = arith.constant 0 : i32
    return %arg0, %c0_i32 : i32, i32
  }
}

</mosaic_0001>

<llo_original>
// kernel: policy_forward_pallas.1
$region0: #{policy_forward_pallas.1}
  #allocation0 [shape = 'u32[]', space=smem, size = 0x4, offset = 0x4, fixed_abs, tag = 'smem constant byte address 0x4 - core index']
  #allocation1 [shape = 'u32[144,128]{1,0:T(1,128)}', space=vmem, size = 0x12000, scoped, tag = 'internal scratch']
  %s0 = inlined_call_operand.vmem [shape: f32[128,8], index: 0, kind: input, shape index: {}]
  %s1 = inlined_call_operand.vmem [shape: f32[8,32], index: 1, kind: input, shape index: {}]
  %s2 = inlined_call_operand.vmem [shape: f32[1,32], index: 2, kind: input, shape index: {}]
  %s3 = inlined_call_operand.vmem [shape: f32[32,32], index: 3, kind: input, shape index: {}]
  %s4 = inlined_call_operand.vmem [shape: f32[1,32], index: 4, kind: input, shape index: {}]
  %s5 = inlined_call_operand.vmem [shape: f32[32,4], index: 5, kind: input, shape index: {}]
  %s6 = inlined_call_operand.vmem [shape: f32[1,4], index: 6, kind: input, shape index: {}]
  %s7 = inlined_call_operand.vmem [shape: f32[1,4], index: 7, kind: input, shape index: {}]
  %s8 = inlined_call_operand.vmem [shape: f32[128,4], index: 8, kind: output, shape index: {}]
  %s9 = sld [smem:[#allocation0]]
  $region42: #{policy_forward_pallas.1} parent=0
    _
  %s11 = ssub.s32 1, %s9
  %s12 = scalar_select 0, %s11, %s9
  // Predicated region
  $region2: #{policy_forward_pallas.1} parent=0 // pred_check
    _
  $region3: #{policy_forward_pallas.1} parent=0 // pred_check_branch
    %14 = sbr.rel (0) target = $region5
  $region4: #{policy_forward_pallas.1} parent=0 // pred_region
    _
  $region5: #{policy_forward_pallas.1} parent=0 // pred_fallthru
    _
  // Predicated region
  $region6: #{policy_forward_pallas.1} parent=0 // pred_check
    _
  $region7: #{policy_forward_pallas.1} parent=0 // pred_check_branch
    %16 = sbr.rel (0) target = $region9
  $region8: #{policy_forward_pallas.1} parent=0 // pred_region
    _
  $region9: #{policy_forward_pallas.1} parent=0 // pred_fallthru
    _
  // Predicated region
  $region10: #{policy_forward_pallas.1} parent=0 // pred_check
    _
  $region11: #{policy_forward_pallas.1} parent=0 // pred_check_branch
    %18 = sbr.rel (0) target = $region13
  $region12: #{policy_forward_pallas.1} parent=0 // pred_region
    _
  $region13: #{policy_forward_pallas.1} parent=0 // pred_fallthru
    _
  // Predicated region
  $region14: #{policy_forward_pallas.1} parent=0 // pred_check
    _
  $region15: #{policy_forward_pallas.1} parent=0 // pred_check_branch
    %20 = sbr.rel (0) target = $region17
  $region16: #{policy_forward_pallas.1} parent=0 // pred_region
    _
  $region17: #{policy_forward_pallas.1} parent=0 // pred_fallthru
    _
  // Predicated region
  $region18: #{policy_forward_pallas.1} parent=0 // pred_check
    _
  $region19: #{policy_forward_pallas.1} parent=0 // pred_check_branch
    %22 = sbr.rel (0) target = $region21
  $region20: #{policy_forward_pallas.1} parent=0 // pred_region
    _
  $region21: #{policy_forward_pallas.1} parent=0 // pred_fallthru
    _
  // Predicated region
  $region22: #{policy_forward_pallas.1} parent=0 // pred_check
    _
  $region23: #{policy_forward_pallas.1} parent=0 // pred_check_branch
    %24 = sbr.rel (0) target = $region25
  $region24: #{policy_forward_pallas.1} parent=0 // pred_region
    _
  $region25: #{policy_forward_pallas.1} parent=0 // pred_fallthru
    _
  // Predicated region
  $region26: #{policy_forward_pallas.1} parent=0 // pred_check
    _
  $region27: #{policy_forward_pallas.1} parent=0 // pred_check_branch
    %26 = sbr.rel (0) target = $region29
  $region28: #{policy_forward_pallas.1} parent=0 // pred_region
    _
  $region29: #{policy_forward_pallas.1} parent=0 // pred_fallthru
    _
  // Predicated region
  $region30: #{policy_forward_pallas.1} parent=0 // pred_check
    _
  $region31: #{policy_forward_pallas.1} parent=0 // pred_check_branch
    %28 = sbr.rel (0) target = $region33
  $region32: #{policy_forward_pallas.1} parent=0 // pred_region
    _
  $region33: #{policy_forward_pallas.1} parent=0 // pred_fallthru
    _
  %v29 = vld [vmem:[%s0] sm:$0xff]
  %v30 = vld [vmem:[%s0 + $0x8] sm:$0xff]
  %v31 = vld [vmem:[%s0 + $0x10] sm:$0xff]
  %v32 = vld [vmem:[%s0 + $0x18] sm:$0xff]
  %v33 = vld [vmem:[%s0 + $0x20] sm:$0xff]
  %v34 = vld [vmem:[%s0 + $0x28] sm:$0xff]
  %v35 = vld [vmem:[%s0 + $0x30] sm:$0xff]
  %v36 = vld [vmem:[%s0 + $0x38] sm:$0xff]
  %v37 = vld [vmem:[%s0 + $0x40] sm:$0xff]
  %v38 = vld [vmem:[%s0 + $0x48] sm:$0xff]
  %v39 = vld [vmem:[%s0 + $0x50] sm:$0xff]
  %v40 = vld [vmem:[%s0 + $0x58] sm:$0xff]
  %v41 = vld [vmem:[%s0 + $0x60] sm:$0xff]
  %v42 = vld [vmem:[%s0 + $0x68] sm:$0xff]
  %v43 = vld [vmem:[%s0 + $0x70] sm:$0xff]
  %v44 = vld [vmem:[%s0 + $0x78] sm:$0xff]
  %v45 = vld [vmem:[%s1] sm:$0xff]
  %v46 = vld [vmem:[%s2] sm:$0x1]
  %v48 = vlaneseq
  %v49 = vshrl.u32 %v48, 7
  %v50 = vsub.s32 0, %v49
  %v51 = vrot.slane %v46, %v50
  %vm53 = vcmask 64512
  %v55 = vsel %vm53, %v29, 0
  %v58 = vsel %vm53, %v30, 0
  %v61 = vsel %vm53, %v31, 0
  %v64 = vsel %vm53, %v32, 0
  %v67 = vsel %vm53, %v33, 0
  %v70 = vsel %vm53, %v34, 0
  %v73 = vsel %vm53, %v35, 0
  %v76 = vsel %vm53, %v36, 0
  %v79 = vsel %vm53, %v37, 0
  %v82 = vsel %vm53, %v38, 0
  %v85 = vsel %vm53, %v39, 0
  %v88 = vsel %vm53, %v40, 0
  %v91 = vsel %vm53, %v41, 0
  %v94 = vsel %vm53, %v42, 0
  %v97 = vsel %vm53, %v43, 0
  %v100 = vsel %vm53, %v44, 0
  %102 = vmatprep.subr.mxu0 0.0
  %103 = vmatpush1.msra.mxu0 %v45
  %104 = vmatprep.subr.mxu0 0.0
  %105 = vmatpush1.msra.mxu0 0.0
  %106 = vmatprep.subr.mxu0 0.0
  %107 = vmatpush1.msra.mxu0 0.0
  %108 = vmatprep.subr.mxu0 0.0
  %109 = vmatpush1.msra.mxu0 0.0
  %110 = vmatprep.subr.mxu0 0.0
  %111 = vmatpush1.msra.mxu0 0.0
  %112 = vmatprep.subr.mxu0 0.0
  %113 = vmatpush1.msra.mxu0 0.0
  %114 = vmatprep.subr.mxu0 0.0
  %115 = vmatpush1.msra.mxu0 0.0
  %116 = vmatprep.subr.mxu0 0.0
  %117 = vmatpush1.msra.mxu0 0.0
  %118 = vmatprep.subr.mxu0 0.0
  %119 = vmatpush1.msra.mxu0 0.0
  %120 = vmatprep.subr.mxu0 0.0
  %121 = vmatpush1.msra.mxu0 0.0
  %122 = vmatprep.subr.mxu0 0.0
  %123 = vmatpush1.msra.mxu0 0.0
  %124 = vmatprep.subr.mxu0 0.0
  %125 = vmatpush1.msra.mxu0 0.0
  %126 = vmatprep.subr.mxu0 0.0
  %127 = vmatpush1.msra.mxu0 0.0
  %128 = vmatprep.subr.mxu0 0.0
  %129 = vmatpush1.msra.mxu0 0.0
  %130 = vmatprep.subr.mxu0 0.0
  %131 = vmatpush1.msra.mxu0 0.0
  %132 = vmatprep.subr.mxu0 0.0
  %133 = vmatpush1.msra.mxu0 0.0
  %134 = vmatprep.subr.mxu0 0.0
  %135 = vmatpush1.msra.mxu0 0.0
  %136 = vmatprep.subr.mxu0 0.0
  %137 = vmatpush1.msra.mxu0 0.0
  %138 = vmatprep.subr.mxu0 0.0
  %139 = vmatpush1.msra.mxu0 0.0
  %140 = vmatprep.subr.mxu0 0.0
  %141 = vmatpush1.msra.mxu0 0.0
  %142 = vmatprep.subr.mxu0 0.0
  %143 = vmatpush1.msra.mxu0 0.0
  %144 = vmatprep.subr.mxu0 0.0
  %145 = vmatpush1.msra.mxu0 0.0
  %146 = vmatprep.subr.mxu0 0.0
  %147 = vmatpush1.msra.mxu0 0.0
  %148 = vmatprep.subr.mxu0 0.0
  %149 = vmatpush1.msra.mxu0 0.0
  %150 = vmatprep.subr.mxu0 0.0
  %151 = vmatpush1.msra.mxu0 0.0
  %152 = vmatprep.subr.mxu0 0.0
  %153 = vmatpush1.msra.mxu0 0.0
  %154 = vmatprep.subr.mxu0 0.0
  %155 = vmatpush1.msra.mxu0 0.0
  %156 = vmatprep.subr.mxu0 0.0
  %157 = vmatpush1.msra.mxu0 0.0
  %158 = vmatprep.subr.mxu0 0.0
  %159 = vmatpush1.msra.mxu0 0.0
  %160 = vmatprep.subr.mxu0 0.0
  %161 = vmatpush1.msra.mxu0 0.0
  %162 = vmatprep.subr.mxu0 0.0
  %163 = vmatpush1.msra.mxu0 0.0
  %164 = vmatprep.subr.mxu0 0.0
  %165 = vmatpush1.msra.mxu0 0.0
  %166 = vmatprep.mubr.f32.mxu0 0.0
  %167 = vmatmul.mubr.f32.gmra.mrb[0].mxu0 %v55
  %v168 = vpop.f32.mrb[0].mxu0
  %v169 = vadd.f32 %v51, %v168
  %v170 = vpop.f32.mrb[0].mxu0
  %171 = vmatprep.mubr.f32.mxu0 0.0
  %172 = vmatmul.mubr.f32.gmra.mrb[0].mxu0 %v58
  %v173 = vpop.f32.mrb[0].mxu0
  %v174 = vadd.f32 %v51, %v173
  %v175 = vpop.f32.mrb[0].mxu0
  %176 = vmatprep.mubr.f32.mxu0 0.0
  %177 = vmatmul.mubr.f32.gmra.mrb[0].mxu0 %v61
  %v178 = vpop.f32.mrb[0].mxu0
  %v179 = vadd.f32 %v51, %v178
  %v180 = vpop.f32.mrb[0].mxu0
  %181 = vmatprep.mubr.f32.mxu0 0.0
  %182 = vmatmul.mubr.f32.gmra.mrb[0].mxu0 %v64
  %v183 = vpop.f32.mrb[0].mxu0
  %v184 = vadd.f32 %v51, %v183
  %v185 = vpop.f32.mrb[0].mxu0
  %186 = vmatprep.mubr.f32.mxu0 0.0
  %187 = vmatmul.mubr.f32.gmra.mrb[0].mxu0 %v67
  %v188 = vpop.f32.mrb[0].mxu0
  %v189 = vadd.f32 %v51, %v188
  %v190 = vpop.f32.mrb[0].mxu0
  %191 = vmatprep.mubr.f32.mxu0 0.0
  %192 = vmatmul.mubr.f32.gmra.mrb[0].mxu0 %v70
  %v193 = vpop.f32.mrb[0].mxu0
  %v194 = vadd.f32 %v51, %v193
  %v195 = vpop.f32.mrb[0].mxu0
  %196 = vmatprep.mubr.f32.mxu0 0.0
  %197 = vmatmul.mubr.f32.gmra.mrb[0].mxu0 %v73
  %v198 = vpop.f32.mrb[0].mxu0
  %v199 = vadd.f32 %v51, %v198
  %v200 = vpop.f32.mrb[0].mxu0
  %201 = vmatprep.mubr.f32.mxu0 0.0
  %202 = vmatmul.mubr.f32.gmra.mrb[0].mxu0 %v76
  %v203 = vpop.f32.mrb[0].mxu0
  %v204 = vadd.f32 %v51, %v203
  %v205 = vpop.f32.mrb[0].mxu0
  %206 = vmatprep.mubr.f32.mxu0 0.0
  %207 = vmatmul.mubr.f32.gmra.mrb[0].mxu0 %v79
  %v208 = vpop.f32.mrb[0].mxu0
  %v209 = vadd.f32 %v51, %v208
  %v210 = vpop.f32.mrb[0].mxu0
  %211 = vmatprep.mubr.f32.mxu0 0.0
  %212 = vmatmul.mubr.f32.gmra.mrb[0].mxu0 %v82
  %v213 = vpop.f32.mrb[0].mxu0
  %v214 = vadd.f32 %v51, %v213
  %v215 = vpop.f32.mrb[0].mxu0
  %216 = vmatprep.mubr.f32.mxu0 0.0
  %217 = vmatmul.mubr.f32.gmra.mrb[0].mxu0 %v85
  %v218 = vpop.f32.mrb[0].mxu0
  %v219 = vadd.f32 %v51, %v218
  %v220 = vpop.f32.mrb[0].mxu0
  %221 = vmatprep.mubr.f32.mxu0 0.0
  %222 = vmatmul.mubr.f32.gmra.mrb[0].mxu0 %v88
  %v223 = vpop.f32.mrb[0].mxu0
  %v224 = vadd.f32 %v51, %v223
  %v225 = vpop.f32.mrb[0].mxu0
  %226 = vmatprep.mubr.f32.mxu0 0.0
  %227 = vmatmul.mubr.f32.gmra.mrb[0].mxu0 %v91
  %v228 = vpop.f32.mrb[0].mxu0
  %v229 = vadd.f32 %v51, %v228
  %v230 = vpop.f32.mrb[0].mxu0
  %231 = vmatprep.mubr.f32.mxu0 0.0
  %232 = vmatmul.mubr.f32.gmra.mrb[0].mxu0 %v94
  %v233 = vpop.f32.mrb[0].mxu0
  %v234 = vadd.f32 %v51, %v233
  %v235 = vpop.f32.mrb[0].mxu0
  %236 = vmatprep.mubr.f32.mxu0 0.0
  %237 = vmatmul.mubr.f32.gmra.mrb[0].mxu0 %v97
  %v238 = vpop.f32.mrb[0].mxu0
  %v239 = vadd.f32 %v51, %v238
  %v240 = vpop.f32.mrb[0].mxu0
  %241 = vmatprep.mubr.f32.mxu0 0.0
  %242 = vmatmul.mubr.f32.gmra.mrb[0].mxu0 %v100
  %v243 = vpop.f32.mrb[0].mxu0
  %v244 = vadd.f32 %v51, %v243
  %v245 = vpop.f32.mrb[0].mxu0
  %246 = vdwg.mxu0
  %v247 = vtanh.pop %v169
  %v248 = vtanh.pop %v174
  %v249 = vtanh.pop %v179
  %v250 = vtanh.pop %v184
  %v251 = vtanh.pop %v189
  %v252 = vtanh.pop %v194
  %v253 = vtanh.pop %v199
  %v254 = vtanh.pop %v204
  %v255 = vtanh.pop %v209
  %v256 = vtanh.pop %v214
  %v257 = vtanh.pop %v219
  %v258 = vtanh.pop %v224
  %v259 = vtanh.pop %v229
  %v260 = vtanh.pop %v234
  %v261 = vtanh.pop %v239
  %v262 = vtanh.pop %v244
  %v263 = vld [vmem:[%s3] sm:$0xff]
  %v264 = vld [vmem:[%s3 + $0x8] sm:$0xff]
  %v265 = vld [vmem:[%s3 + $0x10] sm:$0xff]
  %v266 = vld [vmem:[%s3 + $0x18] sm:$0xff]
  %v267 = vld [vmem:[%s4] sm:$0x1]
  %v269 = vlaneseq
  %v270 = vshrl.u32 %v269, 7
  %v271 = vsub.s32 0, %v270
  %v272 = vrot.slane %v267, %v271
  %vm274 = vcmask 261120
  %v276 = vsel %vm274, %v247, 0
  %v279 = vsel %vm274, %v248, 0
  %v282 = vsel %vm274, %v249, 0
  %v285 = vsel %vm274, %v250, 0
  %v288 = vsel %vm274, %v251, 0
  %v291 = vsel %vm274, %v252, 0
  %v294 = vsel %vm274, %v253, 0
  %v297 = vsel %vm274, %v254, 0
  %v300 = vsel %vm274, %v255, 0
  %v303 = vsel %vm274, %v256, 0
  %v306 = vsel %vm274, %v257, 0
  %v309 = vsel %vm274, %v258, 0
  %v312 = vsel %vm274, %v259, 0
  %v315 = vsel %vm274, %v260, 0
  %v318 = vsel %vm274, %v261, 0
  %v321 = vsel %vm274, %v262, 0
  %323 = vmatprep.subr.mxu0 0.0
  %324 = vmatpush1.msra.mxu0 %v263
  %325 = vmatprep.subr.mxu0 0.0
  %326 = vmatpush1.msra.mxu0 %v264
  %327 = vmatprep.subr.mxu0 0.0
  %328 = vmatpush1.msra.mxu0 %v265
  %329 = vmatprep.subr.mxu0 0.0
  %330 = vmatpush1.msra.mxu0 %v266
  %331 = vmatprep.subr.mxu0 0.0
  %332 = vmatpush1.msra.mxu0 0.0
  %333 = vmatprep.subr.mxu0 0.0
  %334 = vmatpush1.msra.mxu0 0.0
  %335 = vmatprep.subr.mxu0 0.0
  %336 = vmatpush1.msra.mxu0 0.0
  %337 = vmatprep.subr.mxu0 0.0
  %338 = vmatpush1.msra.mxu0 0.0
  %339 = vmatprep.subr.mxu0 0.0
  %340 = vmatpush1.msra.mxu0 0.0
  %341 = vmatprep.subr.mxu0 0.0
  %342 = vmatpush1.msra.mxu0 0.0
  %343 = vmatprep.subr.mxu0 0.0
  %344 = vmatpush1.msra.mxu0 0.0
  %345 = vmatprep.subr.mxu0 0.0
  %346 = vmatpush1.msra.mxu0 0.0
  %347 = vmatprep.subr.mxu0 0.0
  %348 = vmatpush1.msra.mxu0 0.0
  %349 = vmatprep.subr.mxu0 0.0
  %350 = vmatpush1.msra.mxu0 0.0
  %351 = vmatprep.subr.mxu0 0.0
  %352 = vmatpush1.msra.mxu0 0.0
  %353 = vmatprep.subr.mxu0 0.0
  %354 = vmatpush1.msra.mxu0 0.0
  %355 = vmatprep.subr.mxu0 0.0
  %356 = vmatpush1.msra.mxu0 0.0
  %357 = vmatprep.subr.mxu0 0.0
  %358 = vmatpush1.msra.mxu0 0.0
  %359 = vmatprep.subr.mxu0 0.0
  %360 = vmatpush1.msra.mxu0 0.0
  %361 = vmatprep.subr.mxu0 0.0
  %362 = vmatpush1.msra.mxu0 0.0
  %363 = vmatprep.subr.mxu0 0.0
  %364 = vmatpush1.msra.mxu0 0.0
  %365 = vmatprep.subr.mxu0 0.0
  %366 = vmatpush1.msra.mxu0 0.0
  %367 = vmatprep.subr.mxu0 0.0
  %368 = vmatpush1.msra.mxu0 0.0
  %369 = vmatprep.subr.mxu0 0.0
  %370 = vmatpush1.msra.mxu0 0.0
  %371 = vmatprep.subr.mxu0 0.0
  %372 = vmatpush1.msra.mxu0 0.0
  %373 = vmatprep.subr.mxu0 0.0
  %374 = vmatpush1.msra.mxu0 0.0
  %375 = vmatprep.subr.mxu0 0.0
  %376 = vmatpush1.msra.mxu0 0.0
  %377 = vmatprep.subr.mxu0 0.0
  %378 = vmatpush1.msra.mxu0 0.0
  %379 = vmatprep.subr.mxu0 0.0
  %380 = vmatpush1.msra.mxu0 0.0
  %381 = vmatprep.subr.mxu0 0.0
  %382 = vmatpush1.msra.mxu0 0.0
  %383 = vmatprep.subr.mxu0 0.0
  %384 = vmatpush1.msra.mxu0 0.0
  %385 = vmatprep.subr.mxu0 0.0
  %386 = vmatpush1.msra.mxu0 0.0
  %387 = vmatprep.mubr.f32.mxu0 0.0
  %388 = vmatmul.mubr.f32.gmra.mrb[0].mxu0 %v276
  %v389 = vpop.f32.mrb[0].mxu0
  %v390 = vadd.f32 %v272, %v389
  %v391 = vpop.f32.mrb[0].mxu0
  %392 = vmatprep.mubr.f32.mxu0 0.0
  %393 = vmatmul.mubr.f32.gmra.mrb[0].mxu0 %v279
  %v394 = vpop.f32.mrb[0].mxu0
  %v395 = vadd.f32 %v272, %v394
  %v396 = vpop.f32.mrb[0].mxu0
  %397 = vmatprep.mubr.f32.mxu0 0.0
  %398 = vmatmul.mubr.f32.gmra.mrb[0].mxu0 %v282
  %v399 = vpop.f32.mrb[0].mxu0
  %v400 = vadd.f32 %v272, %v399
  %v401 = vpop.f32.mrb[0].mxu0
  %402 = vmatprep.mubr.f32.mxu0 0.0
  %403 = vmatmul.mubr.f32.gmra.mrb[0].mxu0 %v285
  %v404 = vpop.f32.mrb[0].mxu0
  %v405 = vadd.f32 %v272, %v404
  %v406 = vpop.f32.mrb[0].mxu0
  %407 = vmatprep.mubr.f32.mxu0 0.0
  %408 = vmatmul.mubr.f32.gmra.mrb[0].mxu0 %v288
  %v409 = vpop.f32.mrb[0].mxu0
  %v410 = vadd.f32 %v272, %v409
  %v411 = vpop.f32.mrb[0].mxu0
  %412 = vmatprep.mubr.f32.mxu0 0.0
  %413 = vmatmul.mubr.f32.gmra.mrb[0].mxu0 %v291
  %v414 = vpop.f32.mrb[0].mxu0
  %v415 = vadd.f32 %v272, %v414
  %v416 = vpop.f32.mrb[0].mxu0
  %417 = vmatprep.mubr.f32.mxu0 0.0
  %418 = vmatmul.mubr.f32.gmra.mrb[0].mxu0 %v294
  %v419 = vpop.f32.mrb[0].mxu0
  %v420 = vadd.f32 %v272, %v419
  %v421 = vpop.f32.mrb[0].mxu0
  %422 = vmatprep.mubr.f32.mxu0 0.0
  %423 = vmatmul.mubr.f32.gmra.mrb[0].mxu0 %v297
  %v424 = vpop.f32.mrb[0].mxu0
  %v425 = vadd.f32 %v272, %v424
  %v426 = vpop.f32.mrb[0].mxu0
  %427 = vmatprep.mubr.f32.mxu0 0.0
  %428 = vmatmul.mubr.f32.gmra.mrb[0].mxu0 %v300
  %v429 = vpop.f32.mrb[0].mxu0
  %v430 = vadd.f32 %v272, %v429
  %v431 = vpop.f32.mrb[0].mxu0
  %432 = vmatprep.mubr.f32.mxu0 0.0
  %433 = vmatmul.mubr.f32.gmra.mrb[0].mxu0 %v303
  %v434 = vpop.f32.mrb[0].mxu0
  %v435 = vadd.f32 %v272, %v434
  %v436 = vpop.f32.mrb[0].mxu0
  %437 = vmatprep.mubr.f32.mxu0 0.0
  %438 = vmatmul.mubr.f32.gmra.mrb[0].mxu0 %v306
  %v439 = vpop.f32.mrb[0].mxu0
  %v440 = vadd.f32 %v272, %v439
  %v441 = vpop.f32.mrb[0].mxu0
  %442 = vmatprep.mubr.f32.mxu0 0.0
  %443 = vmatmul.mubr.f32.gmra.mrb[0].mxu0 %v309
  %v444 = vpop.f32.mrb[0].mxu0
  %v445 = vadd.f32 %v272, %v444
  %v446 = vpop.f32.mrb[0].mxu0
  %447 = vmatprep.mubr.f32.mxu0 0.0
  %448 = vmatmul.mubr.f32.gmra.mrb[0].mxu0 %v312
  %v449 = vpop.f32.mrb[0].mxu0
  %v450 = vadd.f32 %v272, %v449
  %v451 = vpop.f32.mrb[0].mxu0
  %452 = vmatprep.mubr.f32.mxu0 0.0
  %453 = vmatmul.mubr.f32.gmra.mrb[0].mxu0 %v315
  %v454 = vpop.f32.mrb[0].mxu0
  %v455 = vadd.f32 %v272, %v454
  %v456 = vpop.f32.mrb[0].mxu0
  %457 = vmatprep.mubr.f32.mxu0 0.0
  %458 = vmatmul.mubr.f32.gmra.mrb[0].mxu0 %v318
  %v459 = vpop.f32.mrb[0].mxu0
  %v460 = vadd.f32 %v272, %v459
  %v461 = vpop.f32.mrb[0].mxu0
  %462 = vmatprep.mubr.f32.mxu0 0.0
  %463 = vmatmul.mubr.f32.gmra.mrb[0].mxu0 %v321
  %v464 = vpop.f32.mrb[0].mxu0
  %v465 = vadd.f32 %v272, %v464
  %v466 = vpop.f32.mrb[0].mxu0
  %467 = vdwg.mxu0
  %v468 = vtanh.pop %v390
  %v469 = vtanh.pop %v395
  %v470 = vtanh.pop %v400
  %v471 = vtanh.pop %v405
  %v472 = vtanh.pop %v410
  %v473 = vtanh.pop %v415
  %v474 = vtanh.pop %v420
  %v475 = vtanh.pop %v425
  %v476 = vtanh.pop %v430
  %v477 = vtanh.pop %v435
  %v478 = vtanh.pop %v440
  %v479 = vtanh.pop %v445
  %v480 = vtanh.pop %v450
  %v481 = vtanh.pop %v455
  %v482 = vtanh.pop %v460
  %v483 = vtanh.pop %v465
  %v484 = vld [vmem:[%s5] sm:$0xff]
  %v485 = vld [vmem:[%s5 + $0x8] sm:$0xff]
  %v486 = vld [vmem:[%s5 + $0x10] sm:$0xff]
  %v487 = vld [vmem:[%s5 + $0x18] sm:$0xff]
  %v488 = vld [vmem:[%s6] sm:$0x1]
  %v490 = vlaneseq
  %v491 = vshrl.u32 %v490, 7
  %v492 = vsub.s32 0, %v491
  %v493 = vrot.slane %v488, %v492
  %v496 = vsel %vm274, %v468, 0
  %v499 = vsel %vm274, %v469, 0
  %v502 = vsel %vm274, %v470, 0
  %v505 = vsel %vm274, %v471, 0
  %v508 = vsel %vm274, %v472, 0
  %v511 = vsel %vm274, %v473, 0
  %v514 = vsel %vm274, %v474, 0
  %v517 = vsel %vm274, %v475, 0
  %v520 = vsel %vm274, %v476, 0
  %v523 = vsel %vm274, %v477, 0
  %v526 = vsel %vm274, %v478, 0
  %v529 = vsel %vm274, %v479, 0
  %v532 = vsel %vm274, %v480, 0
  %v535 = vsel %vm274, %v481, 0
  %v538 = vsel %vm274, %v482, 0
  %v541 = vsel %vm274, %v483, 0
  %543 = vmatprep.subr.mxu0 0.0
  %544 = vmatpush1.msra.mxu0 %v484
  %545 = vmatprep.subr.mxu0 0.0
  %546 = vmatpush1.msra.mxu0 %v485
  %547 = vmatprep.subr.mxu0 0.0
  %548 = vmatpush1.msra.mxu0 %v486
  %549 = vmatprep.subr.mxu0 0.0
  %550 = vmatpush1.msra.mxu0 %v487
  %551 = vmatprep.subr.mxu0 0.0
  %552 = vmatpush1.msra.mxu0 0.0
  %553 = vmatprep.subr.mxu0 0.0
  %554 = vmatpush1.msra.mxu0 0.0
  %555 = vmatprep.subr.mxu0 0.0
  %556 = vmatpush1.msra.mxu0 0.0
  %557 = vmatprep.subr.mxu0 0.0
  %558 = vmatpush1.msra.mxu0 0.0
  %559 = vmatprep.subr.mxu0 0.0
  %560 = vmatpush1.msra.mxu0 0.0
  %561 = vmatprep.subr.mxu0 0.0
  %562 = vmatpush1.msra.mxu0 0.0
  %563 = vmatprep.subr.mxu0 0.0
  %564 = vmatpush1.msra.mxu0 0.0
  %565 = vmatprep.subr.mxu0 0.0
  %566 = vmatpush1.msra.mxu0 0.0
  %567 = vmatprep.subr.mxu0 0.0
  %568 = vmatpush1.msra.mxu0 0.0
  %569 = vmatprep.subr.mxu0 0.0
  %570 = vmatpush1.msra.mxu0 0.0
  %571 = vmatprep.subr.mxu0 0.0
  %572 = vmatpush1.msra.mxu0 0.0
  %573 = vmatprep.subr.mxu0 0.0
  %574 = vmatpush1.msra.mxu0 0.0
  %575 = vmatprep.subr.mxu0 0.0
  %576 = vmatpush1.msra.mxu0 0.0
  %577 = vmatprep.subr.mxu0 0.0
  %578 = vmatpush1.msra.mxu0 0.0
  %579 = vmatprep.subr.mxu0 0.0
  %580 = vmatpush1.msra.mxu0 0.0
  %581 = vmatprep.subr.mxu0 0.0
  %582 = vmatpush1.msra.mxu0 0.0
  %583 = vmatprep.subr.mxu0 0.0
  %584 = vmatpush1.msra.mxu0 0.0
  %585 = vmatprep.subr.mxu0 0.0
  %586 = vmatpush1.msra.mxu0 0.0
  %587 = vmatprep.subr.mxu0 0.0
  %588 = vmatpush1.msra.mxu0 0.0
  %589 = vmatprep.subr.mxu0 0.0
  %590 = vmatpush1.msra.mxu0 0.0
  %591 = vmatprep.subr.mxu0 0.0
  %592 = vmatpush1.msra.mxu0 0.0
  %593 = vmatprep.subr.mxu0 0.0
  %594 = vmatpush1.msra.mxu0 0.0
  %595 = vmatprep.subr.mxu0 0.0
  %596 = vmatpush1.msra.mxu0 0.0
  %597 = vmatprep.subr.mxu0 0.0
  %598 = vmatpush1.msra.mxu0 0.0
  %599 = vmatprep.subr.mxu0 0.0
  %600 = vmatpush1.msra.mxu0 0.0
  %601 = vmatprep.subr.mxu0 0.0
  %602 = vmatpush1.msra.mxu0 0.0
  %603 = vmatprep.subr.mxu0 0.0
  %604 = vmatpush1.msra.mxu0 0.0
  %605 = vmatprep.subr.mxu0 0.0
  %606 = vmatpush1.msra.mxu0 0.0
  %607 = vmatprep.mubr.f32.mxu0 0.0
  %608 = vmatmul.mubr.f32.gmra.mrb[0].mxu0 %v496
  %v609 = vpop.f32.mrb[0].mxu0
  %v610 = vadd.f32 %v493, %v609
  %v611 = vpop.f32.mrb[0].mxu0
  %612 = vmatprep.mubr.f32.mxu0 0.0
  %613 = vmatmul.mubr.f32.gmra.mrb[0].mxu0 %v499
  %v614 = vpop.f32.mrb[0].mxu0
  %v615 = vadd.f32 %v493, %v614
  %v616 = vpop.f32.mrb[0].mxu0
  %617 = vmatprep.mubr.f32.mxu0 0.0
  %618 = vmatmul.mubr.f32.gmra.mrb[0].mxu0 %v502
  %v619 = vpop.f32.mrb[0].mxu0
  %v620 = vadd.f32 %v493, %v619
  %v621 = vpop.f32.mrb[0].mxu0
  %622 = vmatprep.mubr.f32.mxu0 0.0
  %623 = vmatmul.mubr.f32.gmra.mrb[0].mxu0 %v505
  %v624 = vpop.f32.mrb[0].mxu0
  %v625 = vadd.f32 %v493, %v624
  %v626 = vpop.f32.mrb[0].mxu0
  %627 = vmatprep.mubr.f32.mxu0 0.0
  %628 = vmatmul.mubr.f32.gmra.mrb[0].mxu0 %v508
  %v629 = vpop.f32.mrb[0].mxu0
  %v630 = vadd.f32 %v493, %v629
  %v631 = vpop.f32.mrb[0].mxu0
  %632 = vmatprep.mubr.f32.mxu0 0.0
  %633 = vmatmul.mubr.f32.gmra.mrb[0].mxu0 %v511
  %v634 = vpop.f32.mrb[0].mxu0
  %v635 = vadd.f32 %v493, %v634
  %v636 = vpop.f32.mrb[0].mxu0
  %637 = vmatprep.mubr.f32.mxu0 0.0
  %638 = vmatmul.mubr.f32.gmra.mrb[0].mxu0 %v514
  %v639 = vpop.f32.mrb[0].mxu0
  %v640 = vadd.f32 %v493, %v639
  %v641 = vpop.f32.mrb[0].mxu0
  %642 = vmatprep.mubr.f32.mxu0 0.0
  %643 = vmatmul.mubr.f32.gmra.mrb[0].mxu0 %v517
  %v644 = vpop.f32.mrb[0].mxu0
  %v645 = vadd.f32 %v493, %v644
  %v646 = vpop.f32.mrb[0].mxu0
  %647 = vmatprep.mubr.f32.mxu0 0.0
  %648 = vmatmul.mubr.f32.gmra.mrb[0].mxu0 %v520
  %v649 = vpop.f32.mrb[0].mxu0
  %v650 = vadd.f32 %v493, %v649
  %v651 = vpop.f32.mrb[0].mxu0
  %652 = vmatprep.mubr.f32.mxu0 0.0
  %653 = vmatmul.mubr.f32.gmra.mrb[0].mxu0 %v523
  %v654 = vpop.f32.mrb[0].mxu0
  %v655 = vadd.f32 %v493, %v654
  %v656 = vpop.f32.mrb[0].mxu0
  %657 = vmatprep.mubr.f32.mxu0 0.0
  %658 = vmatmul.mubr.f32.gmra.mrb[0].mxu0 %v526
  %v659 = vpop.f32.mrb[0].mxu0
  %v660 = vadd.f32 %v493, %v659
  %v661 = vpop.f32.mrb[0].mxu0
  %662 = vmatprep.mubr.f32.mxu0 0.0
  %663 = vmatmul.mubr.f32.gmra.mrb[0].mxu0 %v529
  %v664 = vpop.f32.mrb[0].mxu0
  %v665 = vadd.f32 %v493, %v664
  %v666 = vpop.f32.mrb[0].mxu0
  %667 = vmatprep.mubr.f32.mxu0 0.0
  %668 = vmatmul.mubr.f32.gmra.mrb[0].mxu0 %v532
  %v669 = vpop.f32.mrb[0].mxu0
  %v670 = vadd.f32 %v493, %v669
  %v671 = vpop.f32.mrb[0].mxu0
  %672 = vmatprep.mubr.f32.mxu0 0.0
  %673 = vmatmul.mubr.f32.gmra.mrb[0].mxu0 %v535
  %v674 = vpop.f32.mrb[0].mxu0
  %v675 = vadd.f32 %v493, %v674
  %v676 = vpop.f32.mrb[0].mxu0
  %677 = vmatprep.mubr.f32.mxu0 0.0
  %678 = vmatmul.mubr.f32.gmra.mrb[0].mxu0 %v538
  %v679 = vpop.f32.mrb[0].mxu0
  %v680 = vadd.f32 %v493, %v679
  %v681 = vpop.f32.mrb[0].mxu0
  %682 = vmatprep.mubr.f32.mxu0 0.0
  %683 = vmatmul.mubr.f32.gmra.mrb[0].mxu0 %v541
  %v684 = vpop.f32.mrb[0].mxu0
  %v685 = vadd.f32 %v493, %v684
  %v686 = vpop.f32.mrb[0].mxu0
  %687 = vdwg.mxu0
  %v688 = vld [vmem:[%s7] sm:$0x1]
  %v689 = vtanh.pop %v610
  %v690 = vtanh.pop %v615
  %v691 = vtanh.pop %v620
  %v692 = vtanh.pop %v625
  %v693 = vtanh.pop %v630
  %v694 = vtanh.pop %v635
  %v695 = vtanh.pop %v640
  %v696 = vtanh.pop %v645
  %v697 = vtanh.pop %v650
  %v698 = vtanh.pop %v655
  %v699 = vtanh.pop %v660
  %v700 = vtanh.pop %v665
  %v701 = vtanh.pop %v670
  %v702 = vtanh.pop %v675
  %v703 = vtanh.pop %v680
  %v704 = vtanh.pop %v685
  %v706 = vlaneseq
  %v707 = vshrl.u32 %v706, 7
  %v708 = vsub.s32 0, %v707
  %v709 = vrot.slane %v688, %v708
  %v711 = vmul.f32 %v709, %v689
  %v712 = vmul.f32 %v709, %v690
  %v713 = vmul.f32 %v709, %v691
  %v714 = vmul.f32 %v709, %v692
  %v715 = vmul.f32 %v709, %v693
  %v716 = vmul.f32 %v709, %v694
  %v717 = vmul.f32 %v709, %v695
  %v718 = vmul.f32 %v709, %v696
  %v719 = vmul.f32 %v709, %v697
  %v720 = vmul.f32 %v709, %v698
  %v721 = vmul.f32 %v709, %v699
  %v722 = vmul.f32 %v709, %v700
  %v723 = vmul.f32 %v709, %v701
  %v724 = vmul.f32 %v709, %v702
  %v725 = vmul.f32 %v709, %v703
  %v726 = vmul.f32 %v709, %v704
  %vm727 = vcmask 31744
  %728 = vst.msk [vmem:[%s8] sm:$0xff] %vm727, %v711
  %729 = vst.msk [vmem:[%s8 + $0x8] sm:$0xff] %vm727, %v712
  %730 = vst.msk [vmem:[%s8 + $0x10] sm:$0xff] %vm727, %v713
  %731 = vst.msk [vmem:[%s8 + $0x18] sm:$0xff] %vm727, %v714
  %732 = vst.msk [vmem:[%s8 + $0x20] sm:$0xff] %vm727, %v715
  %733 = vst.msk [vmem:[%s8 + $0x28] sm:$0xff] %vm727, %v716
  %734 = vst.msk [vmem:[%s8 + $0x30] sm:$0xff] %vm727, %v717
  %735 = vst.msk [vmem:[%s8 + $0x38] sm:$0xff] %vm727, %v718
  %736 = vst.msk [vmem:[%s8 + $0x40] sm:$0xff] %vm727, %v719
  %737 = vst.msk [vmem:[%s8 + $0x48] sm:$0xff] %vm727, %v720
  %738 = vst.msk [vmem:[%s8 + $0x50] sm:$0xff] %vm727, %v721
  %739 = vst.msk [vmem:[%s8 + $0x58] sm:$0xff] %vm727, %v722
  %740 = vst.msk [vmem:[%s8 + $0x60] sm:$0xff] %vm727, %v723
  %741 = vst.msk [vmem:[%s8 + $0x68] sm:$0xff] %vm727, %v724
  %742 = vst.msk [vmem:[%s8 + $0x70] sm:$0xff] %vm727, %v725
  %743 = vst.msk [vmem:[%s8 + $0x78] sm:$0xff] %vm727, %v726
  // Predicated region
  $region34: #{policy_forward_pallas.1} parent=0 // pred_check
    _
  $region35: #{policy_forward_pallas.1} parent=0 // pred_check_branch
    %745 = sbr.rel (0) target = $region37
  $region36: #{policy_forward_pallas.1} parent=0 // pred_region
    _
  $region37: #{policy_forward_pallas.1} parent=0 // pred_fallthru
    _
  // Predicated region
  $region38: #{policy_forward_pallas.1} parent=0 // pred_check
    _
  $region39: #{policy_forward_pallas.1} parent=0 // pred_check_branch
    %747 = sbr.rel (0) target = $region41
  $region40: #{policy_forward_pallas.1} parent=0 // pred_region
    _
  $region41: #{policy_forward_pallas.1} parent=0 // pred_fallthru
    _

</llo_original>
